<compile_context>
chip_gen: v5e
topology: v5e:2x2
jax: 0.10.0
libtpu: 0.0.40
codegen_flags: <defaults>
</compile_context>

<pallas_src>
import functools
import math

import jax
import jax.numpy as jnp
from jax import lax
from jax.experimental import pallas as pl
from jax.experimental.pallas import tpu as pltpu

_LANE = 128
_SUBLANE = 8


def _round_up(n, m):
    return ((n + m - 1) // m) * m


def _vmem_capacity_bytes():
    try:
        return int(pltpu.get_tpu_info().vmem_capacity_bytes)
    except Exception:
        return 64 << 20  # conservative (v7x per-core) if the query is unavailable


# --------------------------------------------------------------------------- kernel
def _extractnet_kernel(*refs, hidden_layers, stream, unroll):
    """MLP forward for one batch tile. All matmuls on the MXU, f32 accumulation,
    bias-add / ReLU in f32 (v5e VPU/EUP have no bf16), activations carried in bf16."""
    if hidden_layers > 0:
        if stream:
            (x_ref, w_in_ref, b_in_ref, w_h_hbm, b_h_ref,
             w_out_ref, b_out_ref, o_ref, w_buf, w_sem) = refs
        else:
            (x_ref, w_in_ref, b_in_ref, w_h_ref, b_h_ref,
             w_out_ref, b_out_ref, o_ref) = refs
    else:
        (x_ref, w_in_ref, b_in_ref, w_out_ref, b_out_ref, o_ref) = refs

    cdt = w_in_ref.dtype  # MXU input dtype (bf16)

    if hidden_layers > 0 and stream:
        def start_fetch(l, slot):
            pltpu.make_async_copy(w_h_hbm.at[l], w_buf.at[slot], w_sem.at[slot]).start()

        def wait_fetch(slot):
            pltpu.make_async_copy(w_h_hbm.at[0], w_buf.at[slot], w_sem.at[slot]).wait()

        start_fetch(0, 0)  # prime layer 0's weights while the input matmul runs

    # Input layer + ReLU (x arrives f32 straight from HBM; cast to bf16 in-kernel).
    h = jnp.dot(x_ref[...].astype(cdt), w_in_ref[...],
                preferred_element_type=jnp.float32)
    h = jnp.maximum(h + b_in_ref[...], 0.0).astype(cdt)

    if hidden_layers > 0:
        if stream:
            def hidden_layer(l, h, *, static):
                slot = l & 1
                wait_fetch(slot)
                if static:
                    if l + 1 < hidden_layers:
                        start_fetch(l + 1, 1 - slot)
                else:
                    @pl.when(l + 1 < hidden_layers)
                    def _():
                        start_fetch(l + 1, 1 - slot)
                y = jnp.dot(h, w_buf[slot], preferred_element_type=jnp.float32)
                return jnp.maximum(y + b_h_ref[l], 0.0).astype(cdt)
        else:
            def hidden_layer(l, h, *, static):
                del static
                y = jnp.dot(h, w_h_ref[l], preferred_element_type=jnp.float32)
                return jnp.maximum(y + b_h_ref[l], 0.0).astype(cdt)

        if unroll:
            # Small footprint: static unroll (full LLO scheduler visibility).
            for l in range(hidden_layers):
                h = hidden_layer(l, h, static=True)
        else:
            # Deep / wide nets: visible loop bounds activation live ranges to one buffer.
            h = lax.fori_loop(0, hidden_layers,
                              lambda l, hh: hidden_layer(l, hh, static=False), h)

    # Output layer (no activation); output last dim = D_in (narrow, masked vst is fine).
    out = jnp.dot(h, w_out_ref[...], preferred_element_type=jnp.float32)
    o_ref[...] = (out + b_out_ref[...]).astype(o_ref.dtype)


# ---------------------------------------------------------------- one-time weight prep
def prepare_params(params, *, hidden_layers, compute_dtype=jnp.bfloat16):
    """One-time layout plumbing: pad H to a multiple of 128 lanes, cast weights to bf16.

    Called once at init and cached by the caller, so forward pays no per-call HBM
    pad/cast pass over constant weights.  Padding is exact: padded weight rows/cols and
    bias entries are zero, so padded activation lanes stay exactly zero through every
    ReLU layer and the un-padded D_in-wide output is unchanged.
    """
    D_in, H = params["w_in"].shape
    H_pad = _round_up(H, _LANE)
    ph = H_pad - H
    prepared = {
        "w_in": jnp.pad(params["w_in"], ((0, 0), (0, ph))).astype(compute_dtype),
        "b_in": jnp.pad(params["b_in"], ((0, 0), (0, ph))).astype(jnp.float32),
        "w_out": jnp.pad(params["w_out"], ((0, ph), (0, 0))).astype(compute_dtype),
        "b_out": params["b_out"].astype(jnp.float32),
    }
    if hidden_layers > 0:
        prepared["w_h"] = jnp.pad(
            params["w_h"], ((0, 0), (0, ph), (0, ph))).astype(compute_dtype)
        prepared["b_h"] = jnp.pad(
            params["b_h"], ((0, 0), (0, 0), (0, ph))).astype(jnp.float32)
    return prepared


# --------------------------------------------------------------------------- wrapper
def extractnet_forward(x, prepared, *, hidden_layers, batch_tile=512,
                       stream_hidden_weights=None, out_dtype=jnp.float32):
    """ExtractNet forward. x: [B, D_in] f32 (unpadded); `prepared` from prepare_params."""
    B, D_in = x.shape
    H_pad = prepared["w_in"].shape[1]
    D_out = prepared["w_out"].shape[1]
    cdt = prepared["w_in"].dtype
    cbytes = jnp.dtype(cdt).itemsize

    # Batch tile: fill the MXU M dim, but give multi-TensorCore chips (v7x) at least two
    # grid steps to shard across cores; an extra step costs ~0.35us on single-TC chips.
    bt = _round_up(min(batch_tile, B), _SUBLANE)
    if pl.cdiv(B, bt) == 1 and B >= 4 * _SUBLANE:
        bt = _round_up(pl.cdiv(B, 2), _SUBLANE)
    grid = (pl.cdiv(B, bt),)

    vmem_cap = _vmem_capacity_bytes()

    # --- VMEM residency bookkeeping (per TensorCore). --------------------------------
    wh_bytes = hidden_layers * H_pad * H_pad * cbytes
    fixed_w_bytes = (D_in * H_pad + H_pad * D_out) * cbytes
    bias_bytes = (hidden_layers + 1) * _SUBLANE * H_pad * 4 + _SUBLANE * _LANE * 4
    io_bytes = (2 * bt * _round_up(D_in, _LANE) * 4
                + 2 * bt * _round_up(D_out, _LANE) * jnp.dtype(out_dtype).itemsize)
    act_bytes = 4 * bt * H_pad * 4  # a few f32 matmul-result temporaries

    stream = stream_hidden_weights
    if stream is None:
        # Stream w_h per layer from HBM when the full weight set would not fit
        # comfortably resident (matters most on v7x's 64 MiB per-core VMEM).
        stream = (wh_bytes + fixed_w_bytes + bias_bytes + io_bytes + act_bytes
                  > int(0.7 * vmem_cap))
    stream = bool(stream) and hidden_layers > 0

    resident_bytes = fixed_w_bytes + bias_bytes + io_bytes + act_bytes
    resident_bytes += (2 * H_pad * H_pad * cbytes) if stream else wh_bytes
    vmem_limit = min(max(int(1.3 * resident_bytes) + (8 << 20), 32 << 20), vmem_cap)

    # Static unroll only while the unrolled f32 activation footprint stays small
    # (a static Python `for` does not bound live ranges).
    unroll_budget = (4 << 20) if vmem_cap <= (64 << 20) else (8 << 20)
    unroll = hidden_layers <= 8 and (3 * bt * H_pad * 4) <= unroll_budget

    # --- Specs: weights/biases resident in VMEM (single-buffered, no per-step DMA);
    # only x / out batch tiles are pipelined; w_h optionally streamed from HBM. ---------
    resident = pl.BlockSpec(memory_space=pltpu.MemorySpace.VMEM)
    x_spec = pl.BlockSpec((bt, D_in), lambda i: (i, 0))
    out_spec = pl.BlockSpec((bt, D_out), lambda i: (i, 0))

    args = [x, prepared["w_in"], prepared["b_in"]]
    in_specs = [x_spec, resident, resident]
    scratch_shapes = []
    if hidden_layers > 0:
        args += [prepared["w_h"], prepared["b_h"]]
        if stream:
            in_specs += [pl.BlockSpec(memory_space=pl.ANY), resident]
            scratch_shapes += [pltpu.VMEM((2, H_pad, H_pad), cdt),
                               pltpu.SemaphoreType.DMA((2,))]
        else:
            in_specs += [resident, resident]
    args += [prepared["w_out"], prepared["b_out"]]
    in_specs += [resident, resident]

    kernel = functools.partial(_extractnet_kernel, hidden_layers=hidden_layers,
                               stream=stream, unroll=unroll)

    return pl.pallas_call(
        kernel,
        out_shape=jax.ShapeDtypeStruct((B, D_out), out_dtype),
        grid_spec=pltpu.PrefetchScalarGridSpec(
            num_scalar_prefetch=0,
            grid=grid,
            in_specs=in_specs,
            out_specs=out_spec,
            scratch_shapes=scratch_shapes,
        ),
        compiler_params=pltpu.CompilerParams(
            dimension_semantics=("parallel",),
            vmem_limit_bytes=vmem_limit,
        ),
    )(*args)


# ------------------------------------------------------------------- params / reference
def init_params(key, input_width, hidden_width, hidden_layers):
    """Deterministic synthetic params; weights stored as [in, out] (transposed vs torch)."""
    ks = jax.random.split(key, 6)
    s_in = 1.0 / math.sqrt(input_width)
    s_h = 1.0 / math.sqrt(hidden_width)
    L = hidden_layers
    return {
        "w_in": jax.random.uniform(ks[0], (input_width, hidden_width), jnp.float32, -s_in, s_in),
        "b_in": jax.random.uniform(ks[1], (1, hidden_width), jnp.float32, -s_in, s_in),
        "w_h": jax.random.uniform(ks[2], (L, hidden_width, hidden_width), jnp.float32, -s_h, s_h),
        "b_h": jax.random.uniform(ks[3], (L, 1, hidden_width), jnp.float32, -s_h, s_h),
        "w_out": jax.random.uniform(ks[4], (hidden_width, input_width), jnp.float32, -s_h, s_h),
        "b_out": jax.random.uniform(ks[5], (1, input_width), jnp.float32, -s_h, s_h),
    }


def reference_forward(x, params, hidden_layers, compute_dtype=jnp.bfloat16):
    """Pure-JAX reference with the same bf16-input / f32-accumulate numerics."""
    cdt = compute_dtype
    h = jnp.dot(x.astype(cdt), params["w_in"].astype(cdt), preferred_element_type=jnp.float32)
    h = jnp.maximum(h + params["b_in"], 0.0)
    for l in range(hidden_layers):
        h = jnp.dot(h.astype(cdt), params["w_h"][l].astype(cdt),
                    preferred_element_type=jnp.float32)
        h = jnp.maximum(h + params["b_h"][l], 0.0)
    out = jnp.dot(h.astype(cdt), params["w_out"].astype(cdt),
                  preferred_element_type=jnp.float32)
    return out + params["b_out"]


if __name__ == "__main__":
    input_width = 16
    hidden_width = 32
    hidden_layers = 2
    batch = 8

    key = jax.random.PRNGKey(0)
    kx, kp = jax.random.split(key)
    x = jax.random.normal(kx, (batch, input_width), jnp.float32)
    params = init_params(kp, input_width, hidden_width, hidden_layers)
    prepared = prepare_params(params, hidden_layers=hidden_layers)
    ref = reference_forward(x, params, hidden_layers)

    # Default path: weights fully VMEM-resident.
    fwd = jax.jit(functools.partial(extractnet_forward, hidden_layers=hidden_layers))
    out = jax.block_until_ready(fwd(x, prepared))
    assert out.shape == (batch, input_width)
    assert out.dtype == jnp.float32
    assert jnp.allclose(out, ref, atol=1e-2, rtol=1e-2), "mismatch vs JAX reference"

    # Streaming path (w_h double-buffered from HBM via make_async_copy) exercised too.
    fwd_s = jax.jit(functools.partial(extractnet_forward, hidden_layers=hidden_layers,
                                      stream_hidden_weights=True))
    out_s = jax.block_until_ready(fwd_s(x, prepared))
    assert jnp.allclose(out_s, ref, atol=1e-2, rtol=1e-2), "mismatch (streamed w_h)"

    # Degenerate config: no hidden layers (w_h / b_h never passed to the kernel).
    params0 = init_params(kp, input_width, hidden_width, 0)
    prepared0 = prepare_params(params0, hidden_layers=0)
    fwd0 = jax.jit(functools.partial(extractnet_forward, hidden_layers=0))
    out0 = jax.block_until_ready(fwd0(x, prepared0))
    ref0 = reference_forward(x, params0, 0)
    assert out0.shape == (batch, input_width)
    assert jnp.allclose(out0, ref0, atol=1e-2, rtol=1e-2), "mismatch (hidden_layers=0)"

    print("KERNEL_OK")
</pallas_src>

<mosaic_0001>
module attributes {stable_mosaic.version = 11 : i64} {
  func.func @_extractnet_kernel(%arg0: i32, %arg1: memref<8x16xf32, #tpu.memory_space<vmem>>, %arg2: memref<16x128xbf16, #tpu.memory_space<vmem>>, %arg3: memref<1x128xf32, #tpu.memory_space<vmem>>, %arg4: memref<2x128x128xbf16, #tpu.memory_space<vmem>>, %arg5: memref<2x1x128xf32, #tpu.memory_space<vmem>>, %arg6: memref<128x16xbf16, #tpu.memory_space<vmem>>, %arg7: memref<1x16xf32, #tpu.memory_space<vmem>>, %arg8: memref<8x16xf32, #tpu.memory_space<vmem>>) attributes {dimension_semantics = [#tpu.dimension_semantics<parallel>], iteration_bounds = array<i64: 1>, scalar_prefetch = 0 : i64, scratch_operands = 0 : i64, tpu.core_type = #tpu.core_type<tc>, window_params = [{transform_indices = @transform_0, window_bounds = array<i64: 8, 16>}, {pipeline_mode = #tpu.pipeline_mode<synchronous>, transform_indices = @transform_1, window_bounds = array<i64: 16, 128>}, {pipeline_mode = #tpu.pipeline_mode<synchronous>, transform_indices = @transform_2, window_bounds = array<i64: 1, 128>}, {pipeline_mode = #tpu.pipeline_mode<synchronous>, transform_indices = @transform_3, window_bounds = array<i64: 2, 128, 128>}, {pipeline_mode = #tpu.pipeline_mode<synchronous>, transform_indices = @transform_4, window_bounds = array<i64: 2, 1, 128>}, {pipeline_mode = #tpu.pipeline_mode<synchronous>, transform_indices = @transform_5, window_bounds = array<i64: 128, 16>}, {pipeline_mode = #tpu.pipeline_mode<synchronous>, transform_indices = @transform_6, window_bounds = array<i64: 1, 16>}, {transform_indices = @transform_7, window_bounds = array<i64: 8, 16>}]} {
    %c0 = arith.constant 0 : index
    %c0_0 = arith.constant 0 : index
    %0 = vector.load %arg1[%c0, %c0_0] : memref<8x16xf32, #tpu.memory_space<vmem>>, vector<8x16xf32>
    %1 = arith.truncf %0 : vector<8x16xf32> to vector<8x16xbf16>
    %c0_1 = arith.constant 0 : index
    %c0_2 = arith.constant 0 : index
    %2 = vector.load %arg2[%c0_1, %c0_2] : memref<16x128xbf16, #tpu.memory_space<vmem>>, vector<16x128xbf16>
    %cst = arith.constant dense<0.000000e+00> : vector<8x128xf32>
    %3 = tpu.matmul %1, %2, %cst {dimension_numbers = #tpu.dot_dimension_numbers<[1], [0], [0], [1], [0, 0, 1, 1], [], []>} : vector<8x16xbf16>, vector<16x128xbf16>, vector<8x128xf32> -> vector<8x128xf32>
    %c0_3 = arith.constant 0 : index
    %c0_4 = arith.constant 0 : index
    %4 = vector.load %arg3[%c0_3, %c0_4] : memref<1x128xf32, #tpu.memory_space<vmem>>, vector<1x128xf32>
    %5 = vector.broadcast %4 : vector<1x128xf32> to vector<8x128xf32>
    %6 = arith.addf %3, %5 : vector<8x128xf32>
    %cst_5 = arith.constant 0.000000e+00 : f32
    %7 = vector.broadcast %cst_5 : f32 to vector<8x128xf32>
    %8 = arith.maximumf %6, %7 : vector<8x128xf32>
    %9 = arith.truncf %8 : vector<8x128xf32> to vector<8x128xbf16>
    %c0_6 = arith.constant 0 : index
    %c0_7 = arith.constant 0 : index
    %c0_8 = arith.constant 0 : index
    %10 = vector.load %arg4[%c0_6, %c0_7, %c0_8] : memref<2x128x128xbf16, #tpu.memory_space<vmem>>, vector<1x128x128xbf16>
    %11 = vector.shape_cast %10 : vector<1x128x128xbf16> to vector<128x128xbf16>
    %cst_9 = arith.constant dense<0.000000e+00> : vector<8x128xf32>
    %12 = tpu.matmul %9, %11, %cst_9 {dimension_numbers = #tpu.dot_dimension_numbers<[1], [0], [0], [1], [0, 0, 1, 1], [], []>} : vector<8x128xbf16>, vector<128x128xbf16>, vector<8x128xf32> -> vector<8x128xf32>
    %c0_10 = arith.constant 0 : index
    %c0_11 = arith.constant 0 : index
    %c0_12 = arith.constant 0 : index
    %13 = vector.load %arg5[%c0_10, %c0_11, %c0_12] : memref<2x1x128xf32, #tpu.memory_space<vmem>>, vector<1x1x128xf32>
    %14 = vector.shape_cast %13 : vector<1x1x128xf32> to vector<1x128xf32>
    %15 = vector.broadcast %14 : vector<1x128xf32> to vector<8x128xf32>
    %16 = arith.addf %12, %15 : vector<8x128xf32>
    %cst_13 = arith.constant 0.000000e+00 : f32
    %17 = vector.broadcast %cst_13 : f32 to vector<8x128xf32>
    %18 = arith.maximumf %16, %17 : vector<8x128xf32>
    %19 = arith.truncf %18 : vector<8x128xf32> to vector<8x128xbf16>
    %c1 = arith.constant 1 : index
    %c0_14 = arith.constant 0 : index
    %c0_15 = arith.constant 0 : index
    %20 = vector.load %arg4[%c1, %c0_14, %c0_15] : memref<2x128x128xbf16, #tpu.memory_space<vmem>>, vector<1x128x128xbf16>
    %21 = vector.shape_cast %20 : vector<1x128x128xbf16> to vector<128x128xbf16>
    %cst_16 = arith.constant dense<0.000000e+00> : vector<8x128xf32>
    %22 = tpu.matmul %19, %21, %cst_16 {dimension_numbers = #tpu.dot_dimension_numbers<[1], [0], [0], [1], [0, 0, 1, 1], [], []>} : vector<8x128xbf16>, vector<128x128xbf16>, vector<8x128xf32> -> vector<8x128xf32>
    %c1_17 = arith.constant 1 : index
    %c0_18 = arith.constant 0 : index
    %c0_19 = arith.constant 0 : index
    %23 = vector.load %arg5[%c1_17, %c0_18, %c0_19] : memref<2x1x128xf32, #tpu.memory_space<vmem>>, vector<1x1x128xf32>
    %24 = vector.shape_cast %23 : vector<1x1x128xf32> to vector<1x128xf32>
    %25 = vector.broadcast %24 : vector<1x128xf32> to vector<8x128xf32>
    %26 = arith.addf %22, %25 : vector<8x128xf32>
    %cst_20 = arith.constant 0.000000e+00 : f32
    %27 = vector.broadcast %cst_20 : f32 to vector<8x128xf32>
    %28 = arith.maximumf %26, %27 : vector<8x128xf32>
    %29 = arith.truncf %28 : vector<8x128xf32> to vector<8x128xbf16>
    %c0_21 = arith.constant 0 : index
    %c0_22 = arith.constant 0 : index
    %30 = vector.load %arg6[%c0_21, %c0_22] : memref<128x16xbf16, #tpu.memory_space<vmem>>, vector<128x16xbf16>
    %cst_23 = arith.constant dense<0.000000e+00> : vector<8x16xf32>
    %31 = tpu.matmul %29, %30, %cst_23 {dimension_numbers = #tpu.dot_dimension_numbers<[1], [0], [0], [1], [0, 0, 1, 1], [], []>} : vector<8x128xbf16>, vector<128x16xbf16>, vector<8x16xf32> -> vector<8x16xf32>
    %c0_24 = arith.constant 0 : index
    %c0_25 = arith.constant 0 : index
    %32 = vector.load %arg7[%c0_24, %c0_25] : memref<1x16xf32, #tpu.memory_space<vmem>>, vector<1x16xf32>
    %33 = vector.broadcast %32 : vector<1x16xf32> to vector<8x16xf32>
    %34 = arith.addf %31, %33 : vector<8x16xf32>
    %c0_26 = arith.constant 0 : index
    %c0_27 = arith.constant 0 : index
    %35 = vector.load %arg8[%c0_26, %c0_27] : memref<8x16xf32, #tpu.memory_space<vmem>>, vector<8x16xf32>
    tpu.vector_store %arg8[%c0_26, %c0_27], %34 {strides = array<i32>} : memref<8x16xf32, #tpu.memory_space<vmem>>, vector<8x16xf32>,
    return
  }
  func.func @transform_0(%arg0: i32) -> (i32, i32) {
    %c0_i32 = arith.constant 0 : i32
    %c0_i32_0 = arith.constant 0 : i32
    return %arg0, %c0_i32 : i32, i32
  }
  func.func @transform_1(%arg0: i32) -> (i32, i32) {
    %c0_i32 = arith.constant 0 : i32
    %c0_i32_0 = arith.constant 0 : i32
    %c0_i32_1 = arith.constant 0 : i32
    return %c0_i32, %c0_i32_0 : i32, i32
  }
  func.func @transform_2(%arg0: i32) -> (i32, i32) {
    %c0_i32 = arith.constant 0 : i32
    %c0_i32_0 = arith.constant 0 : i32
    %c0_i32_1 = arith.constant 0 : i32
    return %c0_i32, %c0_i32_0 : i32, i32
  }
  func.func @transform_3(%arg0: i32) -> (i32, i32, i32) {
    %c0_i32 = arith.constant 0 : i32
    %c0_i32_0 = arith.constant 0 : i32
    %c0_i32_1 = arith.constant 0 : i32
    %c0_i32_2 = arith.constant 0 : i32
    return %c0_i32, %c0_i32_0, %c0_i32_1 : i32, i32, i32
  }
  func.func @transform_4(%arg0: i32) -> (i32, i32, i32) {
    %c0_i32 = arith.constant 0 : i32
    %c0_i32_0 = arith.constant 0 : i32
    %c0_i32_1 = arith.constant 0 : i32
    %c0_i32_2 = arith.constant 0 : i32
    return %c0_i32, %c0_i32_0, %c0_i32_1 : i32, i32, i32
  }
  func.func @transform_5(%arg0: i32) -> (i32, i32) {
    %c0_i32 = arith.constant 0 : i32
    %c0_i32_0 = arith.constant 0 : i32
    %c0_i32_1 = arith.constant 0 : i32
    return %c0_i32, %c0_i32_0 : i32, i32
  }
  func.func @transform_6(%arg0: i32) -> (i32, i32) {
    %c0_i32 = arith.constant 0 : i32
    %c0_i32_0 = arith.constant 0 : i32
    %c0_i32_1 = arith.constant 0 : i32
    return %c0_i32, %c0_i32_0 : i32, i32
  }
  func.func @transform_7(%arg0: i32) -> (i32, i32) {
    %c0_i32 = arith.constant 0 : i32
    %c0_i32_0 = arith.constant 0 : i32
    return %arg0, %c0_i32 : i32, i32
  }
}

</mosaic_0001>

<llo_original>
// kernel: extractnet_forward.1
$region0: #{extractnet_forward.1}
  #allocation0 [shape = 'u32[]', space=smem, size = 0x4, offset = 0x4, fixed_abs, tag = 'smem constant byte address 0x4 - core index']
  #allocation1 [shape = 'u32[72,128]{1,0:T(1,128)}', space=vmem, size = 0x9000, scoped, tag = 'internal scratch']
  %s0 = inlined_call_operand.vmem [shape: f32[8,16], index: 0, kind: input, shape index: {}]
  %s1 = inlined_call_operand.vmem [shape: bf16[16,128], index: 1, kind: input, shape index: {}]
  %s2 = inlined_call_operand.vmem [shape: f32[1,128], index: 2, kind: input, shape index: {}]
  %s3 = inlined_call_operand.hbm [shape: bf16[2,128,128], index: 3, kind: input, shape index: {}]
  %s4 = inlined_call_operand.vmem [shape: f32[2,1,128], index: 4, kind: input, shape index: {}]
  %s5 = inlined_call_operand.vmem [shape: bf16[128,16], index: 5, kind: input, shape index: {}]
  %s6 = inlined_call_operand.vmem [shape: f32[1,16], index: 6, kind: input, shape index: {}]
  %s7 = inlined_call_operand.hbm [shape: f32[8,16], index: 7, kind: output, shape index: {}]
  %s8 = sld [smem:[#allocation0]]
  $region42: #{extractnet_forward.1} parent=0
    _
  %s10 = ssub.s32 1, %s8
  %s11 = scalar_select 0, %s10, %s8
  $region1: #{extractnet_forward.1} parent=0
    #allocation2 [shape = 'u8[65536]{0}', space=vmem, size = 0x10000, scoped, tag = 'input window, operand 3, single buffered']
    #allocation3 [shape = 's32[1]{0}', space=sflag, size = 0x4, scoped, tag = 'scoped memory for extractnet_forward.1']
    #allocation4 [shape = 's32[1]{0}', space=sflag, size = 0x4, scoped, tag = 'scoped memory for extractnet_forward.1']
    #allocation5 [shape = 'u8[4096]{0}', space=vmem, size = 0x1000, scoped, tag = 'output window, operand 0, single buffered']
    %12 = vsyncpa [#allocation3], 0
    %13 = vsyncpa [#allocation4], 0
    // Predicated region
    $region2: #{extractnet_forward.1} parent=1 // pred_check
      _
    $region3: #{extractnet_forward.1} parent=1 // pred_check_branch
      %15 = sbr.rel (0) target = $region5
    $region4: #{extractnet_forward.1} parent=1 // pred_region
      _
    $region5: #{extractnet_forward.1} parent=1 // pred_fallthru
      _
    // Predicated region
    $region6: #{extractnet_forward.1} parent=1 // pred_check
      _
    $region7: #{extractnet_forward.1} parent=1 // pred_check_branch
      %17 = sbr.rel (0) target = $region9
    $region8: #{extractnet_forward.1} parent=1 // pred_region
      _
    $region9: #{extractnet_forward.1} parent=1 // pred_fallthru
      _
    // Predicated region
    $region10: #{extractnet_forward.1} parent=1 // pred_check
      _
    $region11: #{extractnet_forward.1} parent=1 // pred_check_branch
      %19 = sbr.rel (0) target = $region13
    $region12: #{extractnet_forward.1} parent=1 // pred_region
      _
    $region13: #{extractnet_forward.1} parent=1 // pred_fallthru
      _
    // Predicated region
    $region14: #{extractnet_forward.1} parent=1 // pred_check
      _
    $region15: #{extractnet_forward.1} parent=1 // pred_check_branch
      %21 = sbr.rel (0) target = $region17
    $region16: #{extractnet_forward.1} parent=1 // pred_region
      %23 = vsyncadd [#allocation3], 0
      %s24 = sshll.u32 %s3, 4
      %s25 = int_to_ptr.hbm [resolvable:$true] %s24
      %s26 = sshll.u32 [#allocation2], 4
      %s27 = int_to_ptr.vmem [resolvable:$true] %s26
      %32 = dma.hbm_to_vmem [thread:$0]  %s25, 2048, %s27, [#allocation3], 64, 64, 4
    $region17: #{extractnet_forward.1} parent=1 // pred_fallthru
      _
    // Predicated region
    $region18: #{extractnet_forward.1} parent=1 // pred_check
      _
    $region19: #{extractnet_forward.1} parent=1 // pred_check_branch
      %34 = sbr.rel (0) target = $region21
    $region20: #{extractnet_forward.1} parent=1 // pred_region
      _
    $region21: #{extractnet_forward.1} parent=1 // pred_fallthru
      _
    // Predicated region
    $region22: #{extractnet_forward.1} parent=1 // pred_check
      _
    $region23: #{extractnet_forward.1} parent=1 // pred_check_branch
      %36 = sbr.rel (0) target = $region25
    $region24: #{extractnet_forward.1} parent=1 // pred_region
      _
    $region25: #{extractnet_forward.1} parent=1 // pred_fallthru
      _
    // Predicated region
    $region26: #{extractnet_forward.1} parent=1 // pred_check
      _
    $region27: #{extractnet_forward.1} parent=1 // pred_check_branch
      %38 = sbr.rel (0) target = $region29
    $region28: #{extractnet_forward.1} parent=1 // pred_region
      _
    $region29: #{extractnet_forward.1} parent=1 // pred_fallthru
      _
    // Predicated region
    $region30: #{extractnet_forward.1} parent=1 // pred_check
      _
    $region31: #{extractnet_forward.1} parent=1 // pred_check_branch
      %40 = sbr.rel (0) target = $region33
    $region32: #{extractnet_forward.1} parent=1 // pred_region
      %42 = dma.done [#allocation3], 2048
    $region33: #{extractnet_forward.1} parent=1 // pred_fallthru
      _
    %v44 = vld [vmem:[%s0] sm:$0xff]
    %v45 = vpack.c.bf16 %v44, %v44
    %v46 = vld [vmem:[%s1] sm:$0xf]
    %v47 = vld [vmem:[%s1 + $0x4] sm:$0xf]
    %v48 = vld [vmem:[%s2] sm:$0x1]
    %v50 = vperm.slane %v48, 0
    %v54 = vunpack.c.l.b16 %v46
    %v55 = vunpack.c.l.b16 %v47
    %v56 = vpack.c.b16 %v55, %v54
    %vm58 = vcmask 130048
    %v60 = vsel %vm58, %v45, 0
    %62 = vmatpush.bf16.msra.mxu0 0
    %63 = vmatpush.bf16.msra.mxu0 0
    %64 = vmatpush.bf16.msra.mxu0 0
    %65 = vmatpush.bf16.msra.mxu0 0
    %66 = vmatpush.bf16.msra.mxu0 0
    %67 = vmatpush.bf16.msra.mxu0 0
    %68 = vmatpush.bf16.msra.mxu0 0
    %69 = vmatpush.bf16.msra.mxu0 %v56
    %70 = vmatmul.bf16.gmra.mxu0 %v60
    %v71 = vpop.f32.mrf.mxu0
    %v72 = vadd.f32 %v50, %v71
    %v73 = vpop.f32.mrf.mxu0
    %74 = vdwg.mxu0
    %v75 = vmax.f32 %v72, 0.0
    %v76 = vpack.c.bf16 %v75, %v75
    %v77 = vld [vmem:[#allocation2] sm:$0xf]
    %v78 = vld [vmem:[#allocation2 + $0x4] sm:$0xf]
    %v79 = vld [vmem:[#allocation2 + $0x8] sm:$0xf]
    %v80 = vld [vmem:[#allocation2 + $0xc] sm:$0xf]
    %v81 = vld [vmem:[#allocation2 + $0x10] sm:$0xf]
    %v82 = vld [vmem:[#allocation2 + $0x14] sm:$0xf]
    %v83 = vld [vmem:[#allocation2 + $0x18] sm:$0xf]
    %v84 = vld [vmem:[#allocation2 + $0x1c] sm:$0xf]
    %v85 = vld [vmem:[#allocation2 + $0x20] sm:$0xf]
    %v86 = vld [vmem:[#allocation2 + $0x24] sm:$0xf]
    %v87 = vld [vmem:[#allocation2 + $0x28] sm:$0xf]
    %v88 = vld [vmem:[#allocation2 + $0x2c] sm:$0xf]
    %v89 = vld [vmem:[#allocation2 + $0x30] sm:$0xf]
    %v90 = vld [vmem:[#allocation2 + $0x34] sm:$0xf]
    %v91 = vld [vmem:[#allocation2 + $0x38] sm:$0xf]
    %v92 = vld [vmem:[#allocation2 + $0x3c] sm:$0xf]
    %v93 = vld [vmem:[%s4] sm:$0x1]
    %v95 = vperm.slane %v93, 0
    %v113 = vunpack.c.l.b16 %v77
    %v114 = vunpack.c.l.b16 %v78
    %v115 = vunpack.c.l.b16 %v79
    %v116 = vunpack.c.l.b16 %v80
    %v117 = vunpack.c.l.b16 %v81
    %v118 = vunpack.c.l.b16 %v82
    %v119 = vunpack.c.l.b16 %v83
    %v120 = vunpack.c.l.b16 %v84
    %v121 = vunpack.c.l.b16 %v85
    %v122 = vunpack.c.l.b16 %v86
    %v123 = vunpack.c.l.b16 %v87
    %v124 = vunpack.c.l.b16 %v88
    %v125 = vunpack.c.l.b16 %v89
    %v126 = vunpack.c.l.b16 %v90
    %v127 = vunpack.c.l.b16 %v91
    %v128 = vunpack.c.l.b16 %v92
    %v129 = vpack.c.b16 %v114, %v113
    %v130 = vpack.c.b16 %v116, %v115
    %v131 = vpack.c.b16 %v118, %v117
    %v132 = vpack.c.b16 %v120, %v119
    %v133 = vpack.c.b16 %v122, %v121
    %v134 = vpack.c.b16 %v124, %v123
    %v135 = vpack.c.b16 %v126, %v125
    %v136 = vpack.c.b16 %v128, %v127
    %145 = vmatpush.bf16.msra.mxu0 %v136
    %146 = vmatpush.bf16.msra.mxu0 %v135
    %147 = vmatpush.bf16.msra.mxu0 %v134
    %148 = vmatpush.bf16.msra.mxu0 %v133
    %149 = vmatpush.bf16.msra.mxu0 %v132
    %150 = vmatpush.bf16.msra.mxu0 %v131
    %151 = vmatpush.bf16.msra.mxu0 %v130
    %152 = vmatpush.bf16.msra.mxu0 %v129
    %153 = vmatmul.bf16.gmra.mxu0 %v76
    %v154 = vpop.f32.mrf.mxu0
    %v155 = vadd.f32 %v95, %v154
    %v156 = vpop.f32.mrf.mxu0
    %157 = vdwg.mxu0
    %v158 = vmax.f32 %v155, 0.0
    %v159 = vpack.c.bf16 %v158, %v158
    %s160 = scalar_lea.vmem [#allocation2], 64
    %v161 = vld [vmem:[%s160] sm:$0xf]
    %v162 = vld [vmem:[%s160 + $0x4] sm:$0xf]
    %v163 = vld [vmem:[%s160 + $0x8] sm:$0xf]
    %v164 = vld [vmem:[%s160 + $0xc] sm:$0xf]
    %v165 = vld [vmem:[%s160 + $0x10] sm:$0xf]
    %v166 = vld [vmem:[%s160 + $0x14] sm:$0xf]
    %v167 = vld [vmem:[%s160 + $0x18] sm:$0xf]
    %v168 = vld [vmem:[%s160 + $0x1c] sm:$0xf]
    %v169 = vld [vmem:[%s160 + $0x20] sm:$0xf]
    %v170 = vld [vmem:[%s160 + $0x24] sm:$0xf]
    %v171 = vld [vmem:[%s160 + $0x28] sm:$0xf]
    %v172 = vld [vmem:[%s160 + $0x2c] sm:$0xf]
    %v173 = vld [vmem:[%s160 + $0x30] sm:$0xf]
    %v174 = vld [vmem:[%s160 + $0x34] sm:$0xf]
    %v175 = vld [vmem:[%s160 + $0x38] sm:$0xf]
    %v176 = vld [vmem:[%s160 + $0x3c] sm:$0xf]
    %s177 = scalar_lea.vmem %s4, 1
    %v178 = vld [vmem:[%s177] sm:$0x1]
    %v180 = vperm.slane %v178, 0
    %v198 = vunpack.c.l.b16 %v161
    %v199 = vunpack.c.l.b16 %v162
    %v200 = vunpack.c.l.b16 %v163
    %v201 = vunpack.c.l.b16 %v164
    %v202 = vunpack.c.l.b16 %v165
    %v203 = vunpack.c.l.b16 %v166
    %v204 = vunpack.c.l.b16 %v167
    %v205 = vunpack.c.l.b16 %v168
    %v206 = vunpack.c.l.b16 %v169
    %v207 = vunpack.c.l.b16 %v170
    %v208 = vunpack.c.l.b16 %v171
    %v209 = vunpack.c.l.b16 %v172
    %v210 = vunpack.c.l.b16 %v173
    %v211 = vunpack.c.l.b16 %v174
    %v212 = vunpack.c.l.b16 %v175
    %v213 = vunpack.c.l.b16 %v176
    %v214 = vpack.c.b16 %v199, %v198
    %v215 = vpack.c.b16 %v201, %v200
    %v216 = vpack.c.b16 %v203, %v202
    %v217 = vpack.c.b16 %v205, %v204
    %v218 = vpack.c.b16 %v207, %v206
    %v219 = vpack.c.b16 %v209, %v208
    %v220 = vpack.c.b16 %v211, %v210
    %v221 = vpack.c.b16 %v213, %v212
    %230 = vmatpush.bf16.msra.mxu0 %v221
    %231 = vmatpush.bf16.msra.mxu0 %v220
    %232 = vmatpush.bf16.msra.mxu0 %v219
    %233 = vmatpush.bf16.msra.mxu0 %v218
    %234 = vmatpush.bf16.msra.mxu0 %v217
    %235 = vmatpush.bf16.msra.mxu0 %v216
    %236 = vmatpush.bf16.msra.mxu0 %v215
    %237 = vmatpush.bf16.msra.mxu0 %v214
    %238 = vmatmul.bf16.gmra.mxu0 %v159
    %v239 = vpop.f32.mrf.mxu0
    %v240 = vadd.f32 %v180, %v239
    %v241 = vpop.f32.mrf.mxu0
    %242 = vdwg.mxu0
    %v243 = vmax.f32 %v240, 0.0
    %v244 = vpack.c.bf16 %v243, %v243
    %v245 = vld [vmem:[%s5] sm:$0xf]
    %v246 = vld [vmem:[%s5 + $0x4] sm:$0xf]
    %v247 = vld [vmem:[%s5 + $0x8] sm:$0xf]
    %v248 = vld [vmem:[%s5 + $0xc] sm:$0xf]
    %v249 = vld [vmem:[%s5 + $0x10] sm:$0xf]
    %v250 = vld [vmem:[%s5 + $0x14] sm:$0xf]
    %v251 = vld [vmem:[%s5 + $0x18] sm:$0xf]
    %v252 = vld [vmem:[%s5 + $0x1c] sm:$0xf]
    %v253 = vld [vmem:[%s5 + $0x20] sm:$0xf]
    %v254 = vld [vmem:[%s5 + $0x24] sm:$0xf]
    %v255 = vld [vmem:[%s5 + $0x28] sm:$0xf]
    %v256 = vld [vmem:[%s5 + $0x2c] sm:$0xf]
    %v257 = vld [vmem:[%s5 + $0x30] sm:$0xf]
    %v258 = vld [vmem:[%s5 + $0x34] sm:$0xf]
    %v259 = vld [vmem:[%s5 + $0x38] sm:$0xf]
    %v260 = vld [vmem:[%s5 + $0x3c] sm:$0xf]
    %v261 = vld [vmem:[%s6] sm:$0x1]
    %v263 = vperm.slane %v261, 0
    %v281 = vunpack.c.l.b16 %v245
    %v282 = vunpack.c.l.b16 %v246
    %v283 = vunpack.c.l.b16 %v247
    %v284 = vunpack.c.l.b16 %v248
    %v285 = vunpack.c.l.b16 %v249
    %v286 = vunpack.c.l.b16 %v250
    %v287 = vunpack.c.l.b16 %v251
    %v288 = vunpack.c.l.b16 %v252
    %v289 = vunpack.c.l.b16 %v253
    %v290 = vunpack.c.l.b16 %v254
    %v291 = vunpack.c.l.b16 %v255
    %v292 = vunpack.c.l.b16 %v256
    %v293 = vunpack.c.l.b16 %v257
    %v294 = vunpack.c.l.b16 %v258
    %v295 = vunpack.c.l.b16 %v259
    %v296 = vunpack.c.l.b16 %v260
    %v297 = vpack.c.b16 %v282, %v281
    %v298 = vpack.c.b16 %v284, %v283
    %v299 = vpack.c.b16 %v286, %v285
    %v300 = vpack.c.b16 %v288, %v287
    %v301 = vpack.c.b16 %v290, %v289
    %v302 = vpack.c.b16 %v292, %v291
    %v303 = vpack.c.b16 %v294, %v293
    %v304 = vpack.c.b16 %v296, %v295
    %313 = vmatpush.bf16.msra.mxu0 %v304
    %314 = vmatpush.bf16.msra.mxu0 %v303
    %315 = vmatpush.bf16.msra.mxu0 %v302
    %316 = vmatpush.bf16.msra.mxu0 %v301
    %317 = vmatpush.bf16.msra.mxu0 %v300
    %318 = vmatpush.bf16.msra.mxu0 %v299
    %319 = vmatpush.bf16.msra.mxu0 %v298
    %320 = vmatpush.bf16.msra.mxu0 %v297
    %321 = vmatmul.bf16.gmra.mxu0 %v244
    %v322 = vpop.f32.mrf.mxu0
    %v323 = vadd.f32 %v263, %v322
    %v324 = vpop.f32.mrf.mxu0
    %325 = vdwg.mxu0
    %326 = vst.msk [vmem:[#allocation5] sm:$0xff] %vm58, %v323
    // Predicated region
    $region34: #{extractnet_forward.1} parent=1 // pred_check
      _
    $region35: #{extractnet_forward.1} parent=1 // pred_check_branch
      %328 = sbr.rel (0) target = $region37
    $region36: #{extractnet_forward.1} parent=1 // pred_region
      %330 = vsyncadd [#allocation4], 0
      %s332 = sshll.u32 [#allocation5], 4
      %s333 = int_to_ptr.vmem [resolvable:$true] %s332
      %s334 = sshll.u32 %s7, 4
      %s335 = int_to_ptr.hbm [resolvable:$true] %s334
      %337 = dma.vmem_to_hbm [thread:$0]  %s333, 128, %s335, [#allocation4]
    $region37: #{extractnet_forward.1} parent=1 // pred_fallthru
      _
    // Predicated region
    $region38: #{extractnet_forward.1} parent=1 // pred_check
      _
    $region39: #{extractnet_forward.1} parent=1 // pred_check_branch
      %339 = sbr.rel (0) target = $region41
    $region40: #{extractnet_forward.1} parent=1 // pred_region
      %341 = dma.done [#allocation4], 128
    $region41: #{extractnet_forward.1} parent=1 // pred_fallthru
      _
    %342 = vsyncpa [#allocation3], 1
    %343 = vsyncpa [#allocation4], 1

</llo_original>
